<compile_context>
chip_gen: v7x
topology: tpu7x:2x2x1
jax: 0.10.0
libtpu: 0.0.40
codegen_flags: <defaults>
</compile_context>

<pallas_src>
import math
import functools

import jax
import jax.numpy as jnp
from jax.experimental import pallas as pl
from jax.experimental.pallas import tpu as pltpu

P_DROP = 0.1
# Per-input-tile byte budget.  2 MiB f32 tiles sit at ~86% of the elementwise
# HBM roofline; double-buffered in+out (~8 MiB) plus temporaries fits every
# generation once vmem_limit_bytes is set explicitly (v7x: 64 MiB physical/TC).
_TILE_BYTES_TARGET = 2 * 1024 * 1024


def _lowbias32(x):
    """Stateless 32-bit avalanche hash (uint32 vector in / uint32 vector out)."""
    x = (x ^ (x >> 16)) * jnp.uint32(0x7FEB352D)
    x = (x ^ (x >> 15)) * jnp.uint32(0x846CA68B)
    x = x ^ (x >> 16)
    return x


def _pe_dropout_kernel(salt_ref, x_ref, pe_ref, o_ref, *, p_drop, training,
                       dim1, grid_swapped):
    # x_ref : (T0, T1, D) tile in VMEM
    # pe_ref: broadcast-compatible PE tile, (T0, 1, D) or (1, T1, D)
    # salt_ref: (1,) int32 in SMEM (seed-derived salt, in [0, 2**30))
    y = x_ref[...] + pe_ref[...]  # broadcast over the batch axis

    if training and p_drop > 0.0:
        t0, t1, t2 = x_ref.shape  # t2 == full d_model
        if grid_swapped:          # batch_first: the OUTER grid axis walks axis 1
            i0, i1 = pl.program_id(1), pl.program_id(0)
        else:
            i0, i1 = pl.program_id(0), pl.program_id(1)

        paired = (t2 % 2) == 0
        t2h = t2 // 2 if paired else t2

        # All grid-invariant index math folded into ONE scalar (scalar-unit
        # arithmetic rides a free VLIW slot).  int32 wraparound only makes hash
        # inputs repeat past ~2^31 hashed positions -- benign for dropout.
        base = (i0 * (t0 * dim1) + i1 * t1) * t2h + salt_ref[0]

        hshape = (t0, t1, t2h)
        r0 = jax.lax.broadcasted_iota(jnp.int32, hshape, 0)
        r1 = jax.lax.broadcasted_iota(jnp.int32, hshape, 1)
        r2 = jax.lax.broadcasted_iota(jnp.int32, hshape, 2)
        local = r0 * (dim1 * t2h) + r1 * t2h + r2
        # Counter-based PRNG: hash(global index + seed salt). Independent per
        # element and per tile; execution order / tiling irrelevant.
        bits = _lowbias32((local + base).astype(jnp.uint32))

        if paired:
            # One hash covers two elements: its 16-bit halves gate the two
            # halves of the last dim.  p is quantized to 1/65536 (negligible).
            thr = jnp.uint32(min(int(round(p_drop * 65536.0)), 65535))
            fields = jnp.concatenate(
                [bits & jnp.uint32(0xFFFF), bits >> 16], axis=-1)
        else:
            thr = jnp.uint32(min(int(round(p_drop * 4294967296.0)), 4294967295))
            fields = bits
        keep = fields >= thr

        # Scale in the input dtype (exact for f32; matches torch-in-bf16
        # behaviour for bf16, at the cost of rounding the scale once).
        scale = jnp.asarray(1.0 / (1.0 - p_drop), dtype=y.dtype)
        y = jnp.where(keep, y * scale, jnp.zeros((), dtype=y.dtype))

    o_ref[...] = y.astype(o_ref.dtype)


def make_positional_encoding_table(d_model: int, max_len: int) -> jnp.ndarray:
    """Deterministic PE buffer, identical to the torch __init__ construction."""
    position = jnp.arange(max_len, dtype=jnp.float32)[:, None]          # (max_len, 1)
    div_term = jnp.exp(
        jnp.arange(0, d_model, 2, dtype=jnp.float32) * (-math.log(10000.0) / d_model)
    )                                                                    # (d_model//2,)
    pe = jnp.zeros((max_len, 1, d_model), dtype=jnp.float32)
    pe = pe.at[:, 0, 0::2].set(jnp.sin(position * div_term))
    pe = pe.at[:, 0, 1::2].set(jnp.cos(position * div_term))
    return pe


def positional_encoding(
    x: jnp.ndarray,
    pe: jnp.ndarray,
    *,
    p_drop: float = P_DROP,
    training: bool = True,
    batch_first: bool = False,
    seed: int = 0,
) -> jnp.ndarray:
    """Pallas forward of PositionalEncoding.

    x : (seq, batch, d_model) if batch_first=False, else (batch, seq, d_model)
    pe: (max_len, 1, d_model)
    """
    if x.ndim != 3:
        raise ValueError("expected 3D input")
    L0, L1, D = x.shape
    seq_len = L1 if batch_first else L0

    if batch_first:
        # pe broadcasts over the leading batch axis: present it as (1, S, D).
        pe_in = pe[:seq_len].reshape(1, seq_len, D).astype(x.dtype)
    else:
        # pe broadcasts over the middle batch axis: keep (S, 1, D).
        pe_in = pe[:seq_len].astype(x.dtype)

    # --- tile selection: tile the two leading axes, keep D (lane axis) whole.
    itemsize = x.dtype.itemsize
    row_bytes = D * itemsize
    sub = max(8, 32 // itemsize)      # sublane multiple: 8 f32 / 16 bf16 / 32 int8

    if L1 * row_bytes <= _TILE_BYTES_TARGET or L1 <= sub:
        t1 = L1                                       # full second axis
    else:
        t1 = max(sub, (_TILE_BYTES_TARGET // row_bytes) // sub * sub)
    t0 = max(1, min(L0, _TILE_BYTES_TARGET // max(1, t1 * row_bytes)))

    # v7x has 2 TensorCores; "parallel" grid axes only help when there are >=2
    # blocks.  Split the leading axis for medium single-block cases.
    if pl.cdiv(L0, t0) * pl.cdiv(L1, t1) < 2 and L0 * L1 * row_bytes >= (512 << 10):
        if L0 >= 2:
            t0 = pl.cdiv(L0, 2)
        elif L1 >= 2 * sub:
            t1 = ((pl.cdiv(L1, 2) + sub - 1) // sub) * sub

    g0, g1 = pl.cdiv(L0, t0), pl.cdiv(L1, t1)

    if batch_first:
        # pe varies with axis 1 (seq): put it on the OUTER grid axis so the pe
        # block index is unchanged across all inner (batch-tile) steps and its
        # DMA is skipped (Pallas re-uses the resident block).
        grid = (g1, g0)
        x_spec = pl.BlockSpec((t0, t1, D), lambda a, b: (b, a, 0))
        out_spec = pl.BlockSpec((t0, t1, D), lambda a, b: (b, a, 0))
        pe_spec = pl.BlockSpec((1, t1, D), lambda a, b: (0, a, 0))
        grid_swapped = True
        pe_tile_bytes = t1 * D * itemsize
    else:
        grid = (g0, g1)
        x_spec = pl.BlockSpec((t0, t1, D), lambda i, j: (i, j, 0))
        out_spec = pl.BlockSpec((t0, t1, D), lambda i, j: (i, j, 0))
        pe_spec = pl.BlockSpec((t0, 1, D), lambda i, j: (i, 0, 0))
        grid_swapped = False
        pe_tile_bytes = t0 * D * itemsize

    # Host-side seed mixing so the kernel only needs a plain int32 scalar add.
    salt = (int(seed) * 2654435761 + 974711) % (1 << 30)
    salt_arr = jnp.asarray([salt], dtype=jnp.int32)

    kernel = functools.partial(
        _pe_dropout_kernel, p_drop=float(p_drop), training=bool(training),
        dim1=L1, grid_swapped=grid_swapped)

    compiler_params = None
    if jax.default_backend() == "tpu":
        tile_bytes = t0 * t1 * D * itemsize
        # Double-buffered x + out (4x tile), double-buffered pe, plus headroom
        # for the int32 hash temporaries & Mosaic scratch.  Never below the
        # v6e/v7x scoped default (32 MiB), never above a v7x-safe 48 MiB.
        vmem_limit = 7 * tile_bytes + 2 * pe_tile_bytes + (4 << 20)
        vmem_limit = int(min(max(vmem_limit, 32 << 20), 48 << 20))
        compiler_params = pltpu.CompilerParams(
            dimension_semantics=("parallel", "parallel"),
            vmem_limit_bytes=vmem_limit)

    return pl.pallas_call(
        kernel,
        out_shape=jax.ShapeDtypeStruct(x.shape, x.dtype),
        grid=grid,
        in_specs=[
            pl.BlockSpec(memory_space=pltpu.MemorySpace.SMEM),  # salt scalar
            x_spec,
            pe_spec,
        ],
        out_specs=out_spec,
        compiler_params=compiler_params,
    )(salt_arr, x, pe_in)


if __name__ == "__main__":
    # Small shapes consistent with the module: seq=8, batch=2, d_model=32.
    d_model = 32
    max_len = 64
    seq_len = 8
    batch = 2

    key = jax.random.PRNGKey(0)
    x_sb = jax.random.normal(key, (seq_len, batch, d_model), dtype=jnp.float32)
    pe = make_positional_encoding_table(d_model, max_len)
    ref = x_sb + pe[:seq_len]

    # --- eval mode (dropout = identity), seq-first layout ---
    y_eval = positional_encoding(x_sb, pe, training=False, batch_first=False)
    y_eval = jax.block_until_ready(y_eval)
    assert y_eval.shape == (seq_len, batch, d_model)
    assert jnp.allclose(y_eval, ref, atol=1e-6), "eval-mode mismatch (seq-first)"

    # --- eval mode, batch_first layout (handled natively, no wrapper transpose) ---
    x_bf = jnp.transpose(x_sb, (1, 0, 2))          # build test input only
    ref_bf = jnp.transpose(ref, (1, 0, 2))
    y_eval_bf = positional_encoding(x_bf, pe, training=False, batch_first=True)
    y_eval_bf = jax.block_until_ready(y_eval_bf)
    assert jnp.allclose(y_eval_bf, ref_bf, atol=1e-6), \
        "eval-mode mismatch (batch-first)"

    # --- training mode (dropout p=0.1, deterministic given seed), seq-first ---
    y_train = positional_encoding(
        x_sb, pe, p_drop=0.1, training=True, batch_first=False, seed=1234
    )
    y_train = jax.block_until_ready(y_train)
    assert y_train.shape == (seq_len, batch, d_model)
    # Every element is either dropped (exact 0) or kept-and-scaled by 1/(1-p).
    scaled = ref * (1.0 / (1.0 - 0.1))
    ok = jnp.logical_or(jnp.abs(y_train) <= 1e-6, jnp.abs(y_train - scaled) <= 1e-5)
    assert bool(jnp.all(ok)), "training-mode values are not in {0, ref/(1-p)}"
    dropped_frac = float(jnp.mean((jnp.abs(y_train) <= 1e-6).astype(jnp.float32)))
    assert 0.01 < dropped_frac < 0.30, f"implausible dropout rate {dropped_frac}"

    # --- training mode, batch_first (exercises the swapped grid + pe reuse) ---
    y_train_bf = positional_encoding(
        x_bf, pe, p_drop=0.1, training=True, batch_first=True, seed=7
    )
    y_train_bf = jax.block_until_ready(y_train_bf)
    assert y_train_bf.shape == (batch, seq_len, d_model)
    scaled_bf = ref_bf * (1.0 / (1.0 - 0.1))
    ok_bf = jnp.logical_or(jnp.abs(y_train_bf) <= 1e-6,
                           jnp.abs(y_train_bf - scaled_bf) <= 1e-5)
    assert bool(jnp.all(ok_bf)), "training-mode values are not in {0, ref/(1-p)} (batch-first)"

    print("KERNEL_OK")
</pallas_src>

<mosaic_0001>
module attributes {stable_mosaic.version = 11 : i64} {
  func.func @_pe_dropout_kernel(%arg0: i32, %arg1: i32, %arg2: memref<1xi32, #tpu.memory_space<smem>>, %arg3: memref<8x2x32xf32, #tpu.memory_space<vmem>>, %arg4: memref<8x1x32xf32, #tpu.memory_space<vmem>>, %arg5: memref<8x2x32xf32, #tpu.memory_space<vmem>>) attributes {dimension_semantics = [#tpu.dimension_semantics<arbitrary>, #tpu.dimension_semantics<arbitrary>], iteration_bounds = array<i64: 1, 1>, scalar_prefetch = 0 : i64, scratch_operands = 0 : i64, tpu.core_type = #tpu.core_type<tc>, window_params = [{transform_indices = @transform_0, window_bounds = array<i64: 1>}, {transform_indices = @transform_1, window_bounds = array<i64: 8, 2, 32>}, {transform_indices = @transform_2, window_bounds = array<i64: 8, 1, 32>}, {transform_indices = @transform_3, window_bounds = array<i64: 8, 2, 32>}]} {
    %c0 = arith.constant 0 : index
    %c0_0 = arith.constant 0 : index
    %c0_1 = arith.constant 0 : index
    %0 = vector.load %arg3[%c0, %c0_0, %c0_1] : memref<8x2x32xf32, #tpu.memory_space<vmem>>, vector<8x2x32xf32>
    %c0_2 = arith.constant 0 : index
    %c0_3 = arith.constant 0 : index
    %c0_4 = arith.constant 0 : index
    %1 = vector.load %arg4[%c0_2, %c0_3, %c0_4] : memref<8x1x32xf32, #tpu.memory_space<vmem>>, vector<8x1x32xf32>
    %2 = vector.broadcast %1 : vector<8x1x32xf32> to vector<8x2x32xf32>
    %3 = arith.addf %0, %2 : vector<8x2x32xf32>
    %c0_5 = arith.constant 0 : index
    %c0_6 = arith.constant 0 : index
    %c0_7 = arith.constant 0 : index
    %4 = vector.load %arg5[%c0_5, %c0_6, %c0_7] : memref<8x2x32xf32, #tpu.memory_space<vmem>>, vector<8x2x32xf32>
    tpu.vector_store %arg5[%c0_5, %c0_6, %c0_7], %3 {strides = array<i32>} : memref<8x2x32xf32, #tpu.memory_space<vmem>>, vector<8x2x32xf32>,
    return
  }
  func.func @transform_0(%arg0: i32, %arg1: i32) -> i32 {
    %c0_i32 = arith.constant 0 : i32
    %c0_i32_0 = arith.constant 0 : i32
    return %c0_i32 : i32
  }
  func.func @transform_1(%arg0: i32, %arg1: i32) -> (i32, i32, i32) {
    %c0_i32 = arith.constant 0 : i32
    %c0_i32_0 = arith.constant 0 : i32
    return %arg0, %arg1, %c0_i32 : i32, i32, i32
  }
  func.func @transform_2(%arg0: i32, %arg1: i32) -> (i32, i32, i32) {
    %c0_i32 = arith.constant 0 : i32
    %c0_i32_0 = arith.constant 0 : i32
    %c0_i32_1 = arith.constant 0 : i32
    return %arg0, %c0_i32, %c0_i32_0 : i32, i32, i32
  }
  func.func @transform_3(%arg0: i32, %arg1: i32) -> (i32, i32, i32) {
    %c0_i32 = arith.constant 0 : i32
    %c0_i32_0 = arith.constant 0 : i32
    return %arg0, %arg1, %c0_i32 : i32, i32, i32
  }
}

</mosaic_0001>

<llo_original>
// kernel: tpu_custom_call.1
$region0: #{tpu_custom_call.1}
  #allocation0 [shape = 'u32[]', space=smem, size = 0x4, offset = 0x4, fixed_abs, tag = 'smem constant byte address 0x4 - core index']
  #allocation1 [shape = 'u32[144,128]{1,0:T(1,128)}', space=vmem, size = 0x12000, scoped, tag = 'internal scratch']
  #allocation2 [shape = 's32[1]{0:T(128)S(6)}', space=smem, size = 0x200, scoped, tag = 'scoped memory for tpu_custom_call.1']
  %s0 = inlined_call_operand.<no memory space> [shape: s32[1], index: 0, kind: input, shape index: {}]
  %s1 = inlined_call_operand.hbm [shape: f32[8,2,32], index: 1, kind: input, shape index: {}]
  %s2 = inlined_call_operand.hbm [shape: f32[8,1,32], index: 2, kind: input, shape index: {}]
  %s3 = inlined_call_operand.hbm [shape: f32[8,2,32], index: 3, kind: output, shape index: {}]
  %s4 = sld [smem:[#allocation0]]
  $region30: #{tpu_custom_call.1} parent=0
    _
  %s6 = ssub.s32 1, %s4
  %s7 = scalar_select 0, %s6, %s4
  %8 = sst [smem:[#allocation2]] %s0
  $region1: #{tpu_custom_call.1} parent=0
    #allocation3 [shape = 'u8[8192]{0}', space=vmem, size = 0x2000, scoped, tag = 'input window, operand 1, single buffered']
    #allocation4 [shape = 's32[1]{0}', space=sflag, size = 0x4, scoped, tag = 'scoped memory for tpu_custom_call.1']
    #allocation5 [shape = 's32[1]{0}', space=sflag, size = 0x4, scoped, tag = 'scoped memory for tpu_custom_call.1']
    #allocation6 [shape = 'u8[4096]{0}', space=vmem, size = 0x1000, scoped, tag = 'input window, operand 2, single buffered']
    #allocation7 [shape = 's32[1]{0}', space=sflag, size = 0x4, scoped, tag = 'scoped memory for tpu_custom_call.1']
    #allocation8 [shape = 'u8[8192]{0}', space=vmem, size = 0x2000, scoped, tag = 'output window, operand 0, single buffered']
    %9 = vsyncpa [#allocation4], 0
    %10 = vsyncpa [#allocation7], 0
    %11 = vsyncpa [#allocation5], 0
    // Predicated region
    $region2: #{tpu_custom_call.1} parent=1 // pred_check
      _
    $region3: #{tpu_custom_call.1} parent=1 // pred_check_branch
      %13 = sbr.rel (0) target = $region5
    $region4: #{tpu_custom_call.1} parent=1 // pred_region
      _
    $region5: #{tpu_custom_call.1} parent=1 // pred_fallthru
      _
    // Predicated region
    $region6: #{tpu_custom_call.1} parent=1 // pred_check
      _
    $region7: #{tpu_custom_call.1} parent=1 // pred_check_branch
      %15 = sbr.rel (0) target = $region9
    $region8: #{tpu_custom_call.1} parent=1 // pred_region
      %s17 = ssub.s32 256, 256
      %18 = vsyncadd [#allocation4], %s17
      %s19 = sshll.u32 [#allocation3], 4
      %s20 = int_to_ptr.vmem [resolvable:$true] %s19
      %25 = dma.hbm_to_vmem [thread:$0]  %s1, 256, %s20, [#allocation4], 32, 32, 2
    $region9: #{tpu_custom_call.1} parent=1 // pred_fallthru
      _
    // Predicated region
    $region10: #{tpu_custom_call.1} parent=1 // pred_check
      _
    $region11: #{tpu_custom_call.1} parent=1 // pred_check_branch
      %27 = sbr.rel (0) target = $region13
    $region12: #{tpu_custom_call.1} parent=1 // pred_region
      %s29 = ssub.s32 128, 128
      %30 = vsyncadd [#allocation7], %s29
      %s31 = sshll.u32 [#allocation6], 4
      %s32 = int_to_ptr.vmem [resolvable:$true] %s31
      %37 = dma.hbm_to_vmem [thread:$0]  %s2, 128, %s32, [#allocation7], 16, 16, 1
    $region13: #{tpu_custom_call.1} parent=1 // pred_fallthru
      _
    // Predicated region
    $region14: #{tpu_custom_call.1} parent=1 // pred_check
      _
    $region15: #{tpu_custom_call.1} parent=1 // pred_check_branch
      %39 = sbr.rel (0) target = $region17
    $region16: #{tpu_custom_call.1} parent=1 // pred_region
      %40 = dma.done [#allocation4], 256
    $region17: #{tpu_custom_call.1} parent=1 // pred_fallthru
      _
    // Predicated region
    $region18: #{tpu_custom_call.1} parent=1 // pred_check
      _
    $region19: #{tpu_custom_call.1} parent=1 // pred_check_branch
      %42 = sbr.rel (0) target = $region21
    $region20: #{tpu_custom_call.1} parent=1 // pred_region
      %43 = dma.done [#allocation7], 128
    $region21: #{tpu_custom_call.1} parent=1 // pred_fallthru
      _
    %v44 = vld [vmem:[#allocation3] sm:$0x3]
    %v45 = vld [vmem:[#allocation3 + $0x2] sm:$0x3]
    %v46 = vld [vmem:[#allocation3 + $0x4] sm:$0x3]
    %v47 = vld [vmem:[#allocation3 + $0x6] sm:$0x3]
    %v48 = vld [vmem:[#allocation3 + $0x8] sm:$0x3]
    %v49 = vld [vmem:[#allocation3 + $0xa] sm:$0x3]
    %v50 = vld [vmem:[#allocation3 + $0xc] sm:$0x3]
    %v51 = vld [vmem:[#allocation3 + $0xe] sm:$0x3]
    %v52 = vld [vmem:[#allocation6] sm:$0x1]
    %v53 = vld [vmem:[#allocation6 + $0x1] sm:$0x1]
    %v54 = vld [vmem:[#allocation6 + $0x2] sm:$0x1]
    %v55 = vld [vmem:[#allocation6 + $0x3] sm:$0x1]
    %v56 = vld [vmem:[#allocation6 + $0x4] sm:$0x1]
    %v57 = vld [vmem:[#allocation6 + $0x5] sm:$0x1]
    %v58 = vld [vmem:[#allocation6 + $0x6] sm:$0x1]
    %v59 = vld [vmem:[#allocation6 + $0x7] sm:$0x1]
    %v68 = vlaneseq
    %v69 = vshrl.u32 %v68, 7
    %v70 = vsub.s32 0, %v69
    %v71 = vrot.slane %v52, %v70
    %v72 = vlaneseq
    %v73 = vshrl.u32 %v72, 7
    %v74 = vsub.s32 0, %v73
    %v75 = vrot.slane %v53, %v74
    %v76 = vlaneseq
    %v77 = vshrl.u32 %v76, 7
    %v78 = vsub.s32 0, %v77
    %v79 = vrot.slane %v54, %v78
    %v80 = vlaneseq
    %v81 = vshrl.u32 %v80, 7
    %v82 = vsub.s32 0, %v81
    %v83 = vrot.slane %v55, %v82
    %v84 = vlaneseq
    %v85 = vshrl.u32 %v84, 7
    %v86 = vsub.s32 0, %v85
    %v87 = vrot.slane %v56, %v86
    %v88 = vlaneseq
    %v89 = vshrl.u32 %v88, 7
    %v90 = vsub.s32 0, %v89
    %v91 = vrot.slane %v57, %v90
    %v92 = vlaneseq
    %v93 = vshrl.u32 %v92, 7
    %v94 = vsub.s32 0, %v93
    %v95 = vrot.slane %v58, %v94
    %v96 = vlaneseq
    %v97 = vshrl.u32 %v96, 7
    %v98 = vsub.s32 0, %v97
    %v99 = vrot.slane %v59, %v98
    %v108 = vadd.f32 %v44, %v71
    %v109 = vadd.f32 %v45, %v75
    %v110 = vadd.f32 %v46, %v79
    %v111 = vadd.f32 %v47, %v83
    %v112 = vadd.f32 %v48, %v87
    %v113 = vadd.f32 %v49, %v91
    %v114 = vadd.f32 %v50, %v95
    %v115 = vadd.f32 %v51, %v99
    %vm116 = vcmask 254976
    %117 = vst.msk [vmem:[#allocation8] sm:$0x3] %vm116, %v108
    %118 = vst.msk [vmem:[#allocation8 + $0x2] sm:$0x3] %vm116, %v109
    %119 = vst.msk [vmem:[#allocation8 + $0x4] sm:$0x3] %vm116, %v110
    %120 = vst.msk [vmem:[#allocation8 + $0x6] sm:$0x3] %vm116, %v111
    %121 = vst.msk [vmem:[#allocation8 + $0x8] sm:$0x3] %vm116, %v112
    %122 = vst.msk [vmem:[#allocation8 + $0xa] sm:$0x3] %vm116, %v113
    %123 = vst.msk [vmem:[#allocation8 + $0xc] sm:$0x3] %vm116, %v114
    %124 = vst.msk [vmem:[#allocation8 + $0xe] sm:$0x3] %vm116, %v115
    // Predicated region
    $region22: #{tpu_custom_call.1} parent=1 // pred_check
      _
    $region23: #{tpu_custom_call.1} parent=1 // pred_check_branch
      %126 = sbr.rel (0) target = $region25
    $region24: #{tpu_custom_call.1} parent=1 // pred_region
      %s128 = ssub.s32 256, 256
      %129 = vsyncadd [#allocation5], %s128
      %s130 = sshll.u32 [#allocation8], 4
      %s131 = int_to_ptr.vmem [resolvable:$true] %s130
      %136 = dma.vmem_to_hbm [thread:$0]  %s131, 256, %s3, [#allocation5], 32, 32, 2
    $region25: #{tpu_custom_call.1} parent=1 // pred_fallthru
      _
    // Predicated region
    $region26: #{tpu_custom_call.1} parent=1 // pred_check
      _
    $region27: #{tpu_custom_call.1} parent=1 // pred_check_branch
      %138 = sbr.rel (0) target = $region29
    $region28: #{tpu_custom_call.1} parent=1 // pred_region
      %139 = dma.done [#allocation5], 256
    $region29: #{tpu_custom_call.1} parent=1 // pred_fallthru
      _
    %140 = vsyncpa [#allocation4], 1
    %141 = vsyncpa [#allocation7], 1
    %142 = vsyncpa [#allocation5], 1

</llo_original>
